<compile_context>
chip_gen: v6e
topology: v6e:2x2x1
jax: 0.10.0
libtpu: 0.0.40
codegen_flags: <defaults>
</compile_context>

<pallas_src>
import functools

import jax
import jax.numpy as jnp
from jax import lax
from jax.experimental import pallas as pl
from jax.experimental.pallas import tpu as pltpu


def _ssam_kernel(x_ref, w1_ref, w2_ref, o_ref, sum_acc, max_acc, *,
                 inv_l, lt, tail, needs_mask):
    # x_ref: (BT, C, LT); w1_ref: (Cr, C); w2_ref: (C, Cr); o_ref: (BT, C)
    # sum_acc / max_acc: (BT, C) f32 scratch (tiny, resident across L steps).
    l = pl.program_id(1)
    n_l = pl.num_programs(1)

    x = x_ref[...]

    if needs_mask:
        # cdiv-tiled L with a ragged tail: lanes past L in the last tile hold
        # unspecified data -> mask them (0 for the sum, -inf for the max).
        limit = jnp.where(l == n_l - 1, tail, lt)
        lane = lax.broadcasted_iota(jnp.int32, x.shape, 2)
        valid = lane < limit
        part_sum = jnp.sum(jnp.where(valid, x, jnp.zeros_like(x)),
                           axis=-1, dtype=jnp.float32)              # (BT, C)
        part_max = jnp.max(jnp.where(valid, x, jnp.full_like(x, -jnp.inf)),
                           axis=-1).astype(jnp.float32)              # (BT, C)
    else:
        part_sum = jnp.sum(x, axis=-1, dtype=jnp.float32)            # f32 accum
        part_max = jnp.max(x, axis=-1).astype(jnp.float32)

    # --- pooling accumulation: tiny (BT, C) accumulators, no tile stores ---
    @pl.when(l == 0)
    def _():
        sum_acc[...] = part_sum
        max_acc[...] = part_max

    @pl.when(l > 0)
    def _():
        sum_acc[...] += part_sum
        max_acc[...] = jnp.maximum(max_acc[...], part_max)

    # --- finalize: fused stacked FC + sigmoid + store ---
    @pl.when(l == n_l - 1)
    def _():
        avg = sum_acc[...] * inv_l                          # (BT, C)
        mx = max_acc[...]                                   # (BT, C)
        bt = avg.shape[0]

        # Stack avg/max rows -> one matmul pair instead of two.
        v = jnp.concatenate([avg, mx], axis=0)              # (2*BT, C)

        w1 = w1_ref[...].astype(jnp.float32)                # (Cr, C)
        w2 = w2_ref[...].astype(jnp.float32)                # (C, Cr)

        # Contract the shared axis directly (no transposes).
        h = lax.dot_general(v, w1, (((1,), (1,)), ((), ())),
                            preferred_element_type=jnp.float32)   # (2*BT, Cr)
        h = jnp.maximum(h, 0.0)                                   # ReLU
        y = lax.dot_general(h, w2, (((1,), (1,)), ((), ())),
                            preferred_element_type=jnp.float32)   # (2*BT, C)

        out = jax.nn.sigmoid(y[:bt] + y[bt:])                     # (BT, C)
        o_ref[...] = out.astype(o_ref.dtype)


def _tpu_vmem_capacity_bytes():
    try:
        return int(pltpu.get_tpu_info().vmem_capacity_bytes)
    except Exception:
        return 64 << 20  # conservative fallback (v7x per-TC VMEM)


def _budgets():
    """(per-x-tile byte budget, vmem_limit_bytes) derived per generation."""
    cap = _tpu_vmem_capacity_bytes()
    if cap >= (96 << 20):        # v5e / v6e: 128 MiB physical VMEM
        return 14 << 20, 64 << 20
    # v7x: 64 MiB per TensorCore -> leave compiler headroom.
    return 10 << 20, 48 << 20


def _choose_b_tile(B):
    # Output block (bt, C): bt is second-to-last -> must be a multiple of 8 or
    # equal B.  Prefer bt=8 so B // bt >= 2 parallel steps (v7x megacore) when
    # B >= 16; otherwise fall back to the full batch.
    if B % 8 == 0:
        return 8
    return B


def _choose_l_tile(L, bt, C, itemsize, tile_budget):
    # Largest multiple-of-128 L tile whose x block stays under tile_budget.
    # If the whole L fits, use a single full-L block (always a legal block).
    row_bytes = max(1, bt * C * itemsize)
    max_lt = max(128, (tile_budget // row_bytes) // 128 * 128)
    if L <= max_lt:
        return L
    return max_lt


def ssam_forward(x, w1, w2, *, b_tile=None, l_tile=None):
    """x: (B, C, L); w1: (C//r, C); w2: (C, C//r). Returns (B, C, 1)."""
    B, C, L = x.shape
    Cr = w1.shape[0]
    itemsize = jnp.dtype(x.dtype).itemsize

    tile_budget, vmem_limit = _budgets()

    bt = b_tile if b_tile is not None else _choose_b_tile(B)
    assert B % bt == 0, (B, bt)
    lt = l_tile if l_tile is not None else _choose_l_tile(
        L, bt, C, itemsize, tile_budget)
    assert 1 <= lt <= L, (L, lt)

    grid_l = pl.cdiv(L, lt)
    grid = (B // bt, grid_l)
    tail = L - (grid_l - 1) * lt          # length of the last (ragged) L tile
    needs_mask = (L % lt) != 0

    kernel = functools.partial(_ssam_kernel, inv_l=1.0 / L, lt=lt, tail=tail,
                               needs_mask=needs_mask)

    # x spec: tiled over (B, L); C stays whole on sublanes/lanes.  Use a
    # 3-deep pipeline on the streaming input when the L loop is long enough
    # and the extra buffer fits comfortably under the scoped-VMEM limit.
    x_index_map = lambda b, l: (b, 0, l)
    tile_bytes = bt * C * lt * itemsize
    x_spec = pl.BlockSpec((bt, C, lt), x_index_map)
    if (grid_l >= 3 and 3 * tile_bytes + (4 << 20) <= vmem_limit
            and hasattr(pl, "Buffered")):
        try:
            x_spec = pl.BlockSpec((bt, C, lt), x_index_map,
                                  pipeline_mode=pl.Buffered(3))
        except TypeError:
            pass  # older BlockSpec signature: keep default double-buffering

    out = pl.pallas_call(
        kernel,
        out_shape=jax.ShapeDtypeStruct((B, C), x.dtype),
        grid_spec=pltpu.PrefetchScalarGridSpec(
            num_scalar_prefetch=0,
            grid=grid,
            in_specs=[
                x_spec,
                # Tiny weights: resident (same block every step).
                pl.BlockSpec((Cr, C), lambda b, l: (0, 0)),
                pl.BlockSpec((C, Cr), lambda b, l: (0, 0)),
            ],
            # Output block constant across the L (reduction) axis -> resident
            # output; written only in the finalize branch.
            out_specs=pl.BlockSpec((bt, C), lambda b, l: (b, 0)),
            scratch_shapes=[
                pltpu.VMEM((bt, C), jnp.float32),   # running sum (tiny)
                pltpu.VMEM((bt, C), jnp.float32),   # running max (tiny)
            ],
        ),
        compiler_params=pltpu.CompilerParams(
            dimension_semantics=("parallel", "arbitrary"),
            vmem_limit_bytes=vmem_limit,
        ),
    )(x, w1, w2)

    # PyTorch output keeps the pooled length-1 axis: (B, C, 1).
    return out[:, :, None]


def ssam_reference(x, w1, w2):
    avg = jnp.mean(x, axis=-1)
    mx = jnp.max(x, axis=-1)

    def fc(v):
        return jnp.maximum(v @ w1.T, 0.0) @ w2.T

    return jax.nn.sigmoid(fc(avg) + fc(mx))[:, :, None]


if __name__ == "__main__":
    # Shapes consistent with SSAM(num_channels=64, ratio=16) on a (B, C, L) input.
    B, C, L, ratio = 2, 64, 256, 16
    Cr = C // ratio

    key = jax.random.PRNGKey(0)
    kx, k1, k2, kx2 = jax.random.split(key, 4)

    x = jax.random.normal(kx, (B, C, L), dtype=jnp.float32)
    # Deterministic init mimicking PyTorch kaiming-uniform scale for 1x1 conv.
    bound1 = (1.0 / C) ** 0.5
    bound2 = (1.0 / Cr) ** 0.5
    w1 = jax.random.uniform(k1, (Cr, C), jnp.float32, -bound1, bound1)
    w2 = jax.random.uniform(k2, (C, Cr), jnp.float32, -bound2, bound2)

    ref = ssam_reference(x, w1, w2)

    # 1) Default tiling (single full-L step at this toy size).
    out = jax.block_until_ready(ssam_forward(x, w1, w2))
    assert out.shape == (B, C, 1), out.shape
    assert jnp.allclose(out, ref, atol=1e-5, rtol=1e-5), float(
        jnp.max(jnp.abs(out - ref)))

    # 2) Forced multi-step L reduction (exact tiling) -> accumulator path.
    out2 = jax.block_until_ready(ssam_forward(x, w1, w2, l_tile=128))
    assert jnp.allclose(out2, ref, atol=1e-5, rtol=1e-5), float(
        jnp.max(jnp.abs(out2 - ref)))

    # 3) Non-multiple-of-128 length -> cdiv grid + masked ragged tail
    #    (and >=3 L steps, exercising the deeper-buffered input pipeline).
    L2 = 300
    x2 = jax.random.normal(kx2, (B, C, L2), dtype=jnp.float32)
    ref2 = ssam_reference(x2, w1, w2)
    out3 = jax.block_until_ready(ssam_forward(x2, w1, w2, l_tile=128))
    assert out3.shape == (B, C, 1), out3.shape
    assert jnp.allclose(out3, ref2, atol=1e-5, rtol=1e-5), float(
        jnp.max(jnp.abs(out3 - ref2)))

    print("KERNEL_OK")
</pallas_src>

<mosaic_0001>
module attributes {stable_mosaic.version = 11 : i64} {
  func.func @_ssam_kernel(%arg0: i32, %arg1: i32, %arg2: memref<2x64x256xf32, #tpu.memory_space<vmem>>, %arg3: memref<4x64xf32, #tpu.memory_space<vmem>>, %arg4: memref<64x4xf32, #tpu.memory_space<vmem>>, %arg5: memref<2x64xf32, #tpu.memory_space<vmem>>, %arg6: memref<2x64xf32, #tpu.memory_space<vmem>>, %arg7: memref<2x64xf32, #tpu.memory_space<vmem>>) attributes {dimension_semantics = [#tpu.dimension_semantics<parallel>, #tpu.dimension_semantics<arbitrary>], iteration_bounds = array<i64: 1, 1>, scalar_prefetch = 0 : i64, scratch_operands = 2 : i64, tpu.core_type = #tpu.core_type<tc>, window_params = [{transform_indices = @transform_0, window_bounds = array<i64: 2, 64, 256>}, {pipeline_mode = #tpu.pipeline_mode<synchronous>, transform_indices = @transform_1, window_bounds = array<i64: 4, 64>}, {pipeline_mode = #tpu.pipeline_mode<synchronous>, transform_indices = @transform_2, window_bounds = array<i64: 64, 4>}, {transform_indices = @transform_3, window_bounds = array<i64: 2, 64>}]} {
    %c0 = arith.constant 0 : index
    %c0_0 = arith.constant 0 : index
    %c0_1 = arith.constant 0 : index
    %0 = vector.load %arg2[%c0, %c0_0, %c0_1] : memref<2x64x256xf32, #tpu.memory_space<vmem>>, vector<2x64x256xf32>
    %cst = arith.constant dense<0.000000e+00> : vector<2x64xf32>
    %1 = vector.multi_reduction <add>, %0, %cst [2] : vector<2x64x256xf32> to vector<2x64xf32>
    %cst_2 = arith.constant dense<0xFF800000> : vector<2x64xf32>
    %2 = vector.multi_reduction <maximumf>, %0, %cst_2 [2] : vector<2x64x256xf32> to vector<2x64xf32>
    %c0_i32 = arith.constant 0 : i32
    %3 = arith.cmpi eq, %arg1, %c0_i32 : i32
    %4 = arith.extui %3 : i1 to i32
    %c0_i32_3 = arith.constant 0 : i32
    %5 = arith.cmpi ne, %4, %c0_i32_3 : i32
    scf.if %5 {
      %c0_8 = arith.constant 0 : index
      %c0_9 = arith.constant 0 : index
      %12 = vector.load %arg6[%c0_8, %c0_9] : memref<2x64xf32, #tpu.memory_space<vmem>>, vector<2x64xf32>
      tpu.vector_store %arg6[%c0_8, %c0_9], %1 {strides = array<i32>} : memref<2x64xf32, #tpu.memory_space<vmem>>, vector<2x64xf32>,
      %c0_10 = arith.constant 0 : index
      %c0_11 = arith.constant 0 : index
      %13 = vector.load %arg7[%c0_10, %c0_11] : memref<2x64xf32, #tpu.memory_space<vmem>>, vector<2x64xf32>
      tpu.vector_store %arg7[%c0_10, %c0_11], %2 {strides = array<i32>} : memref<2x64xf32, #tpu.memory_space<vmem>>, vector<2x64xf32>,
    } else {
    }
    %c0_i32_4 = arith.constant 0 : i32
    %6 = arith.cmpi sgt, %arg1, %c0_i32_4 : i32
    %7 = arith.extui %6 : i1 to i32
    %c0_i32_5 = arith.constant 0 : i32
    %8 = arith.cmpi ne, %7, %c0_i32_5 : i32
    scf.if %8 {
      %c0_8 = arith.constant 0 : index
      %c0_9 = arith.constant 0 : index
      %12 = vector.load %arg6[%c0_8, %c0_9] : memref<2x64xf32, #tpu.memory_space<vmem>>, vector<2x64xf32>
      %13 = arith.addf %12, %1 : vector<2x64xf32>
      %c0_10 = arith.constant 0 : index
      %c0_11 = arith.constant 0 : index
      %14 = vector.load %arg6[%c0_10, %c0_11] : memref<2x64xf32, #tpu.memory_space<vmem>>, vector<2x64xf32>
      tpu.vector_store %arg6[%c0_10, %c0_11], %13 {strides = array<i32>} : memref<2x64xf32, #tpu.memory_space<vmem>>, vector<2x64xf32>,
      %c0_12 = arith.constant 0 : index
      %c0_13 = arith.constant 0 : index
      %15 = vector.load %arg7[%c0_12, %c0_13] : memref<2x64xf32, #tpu.memory_space<vmem>>, vector<2x64xf32>
      %16 = arith.maximumf %15, %2 : vector<2x64xf32>
      %c0_14 = arith.constant 0 : index
      %c0_15 = arith.constant 0 : index
      %17 = vector.load %arg7[%c0_14, %c0_15] : memref<2x64xf32, #tpu.memory_space<vmem>>, vector<2x64xf32>
      tpu.vector_store %arg7[%c0_14, %c0_15], %16 {strides = array<i32>} : memref<2x64xf32, #tpu.memory_space<vmem>>, vector<2x64xf32>,
    } else {
    }
    %c0_i32_6 = arith.constant 0 : i32
    %9 = arith.cmpi eq, %arg1, %c0_i32_6 : i32
    %10 = arith.extui %9 : i1 to i32
    %c0_i32_7 = arith.constant 0 : i32
    %11 = arith.cmpi ne, %10, %c0_i32_7 : i32
    scf.if %11 {
      %c0_8 = arith.constant 0 : index
      %c0_9 = arith.constant 0 : index
      %12 = vector.load %arg6[%c0_8, %c0_9] : memref<2x64xf32, #tpu.memory_space<vmem>>, vector<2x64xf32>
      %cst_10 = arith.constant 3.906250e-03 : f32
      %13 = vector.broadcast %cst_10 : f32 to vector<2x64xf32>
      %14 = arith.mulf %12, %13 : vector<2x64xf32>
      %c0_11 = arith.constant 0 : index
      %c0_12 = arith.constant 0 : index
      %15 = vector.load %arg7[%c0_11, %c0_12] : memref<2x64xf32, #tpu.memory_space<vmem>>, vector<2x64xf32>
      %16 = tpu.concatenate %14, %15 in 0 : vector<2x64xf32>, vector<2x64xf32> -> vector<4x64xf32>
      %c0_13 = arith.constant 0 : index
      %c0_14 = arith.constant 0 : index
      %17 = vector.load %arg3[%c0_13, %c0_14] : memref<4x64xf32, #tpu.memory_space<vmem>>, vector<4x64xf32>
      %c0_15 = arith.constant 0 : index
      %c0_16 = arith.constant 0 : index
      %18 = vector.load %arg4[%c0_15, %c0_16] : memref<64x4xf32, #tpu.memory_space<vmem>>, vector<64x4xf32>
      %cst_17 = arith.constant dense<0.000000e+00> : vector<4x4xf32>
      %19 = tpu.matmul %16, %17, %cst_17 {dimension_numbers = #tpu.dot_dimension_numbers<[1], [1], [0], [0], [0, 0, 1, 0], [], []>} : vector<4x64xf32>, vector<4x64xf32>, vector<4x4xf32> -> vector<4x4xf32>
      %cst_18 = arith.constant 0.000000e+00 : f32
      %20 = vector.broadcast %cst_18 : f32 to vector<4x4xf32>
      %21 = arith.maximumf %19, %20 : vector<4x4xf32>
      %cst_19 = arith.constant dense<0.000000e+00> : vector<4x64xf32>
      %22 = tpu.matmul %21, %18, %cst_19 {dimension_numbers = #tpu.dot_dimension_numbers<[1], [1], [0], [0], [0, 0, 1, 0], [], []>} : vector<4x4xf32>, vector<64x4xf32>, vector<4x64xf32> -> vector<4x64xf32>
      %23 = vector.extract_strided_slice %22 {offsets = [0, 0], sizes = [2, 64], strides = [1, 1]} : vector<4x64xf32> to vector<2x64xf32>
      %24 = vector.extract_strided_slice %22 {offsets = [2, 0], sizes = [2, 64], strides = [1, 1]} : vector<4x64xf32> to vector<2x64xf32>
      %25 = arith.addf %23, %24 : vector<2x64xf32>
      %26 = arith.negf %25 : vector<2x64xf32>
      %27 = math.exp %26 : vector<2x64xf32>
      %cst_20 = arith.constant 1.000000e+00 : f32
      %28 = vector.broadcast %cst_20 : f32 to vector<2x64xf32>
      %29 = arith.addf %28, %27 : vector<2x64xf32>
      %30 = arith.divf %28, %29 : vector<2x64xf32>
      %c0_21 = arith.constant 0 : index
      %c0_22 = arith.constant 0 : index
      %31 = vector.load %arg5[%c0_21, %c0_22] : memref<2x64xf32, #tpu.memory_space<vmem>>, vector<2x64xf32>
      tpu.vector_store %arg5[%c0_21, %c0_22], %30 {strides = array<i32>} : memref<2x64xf32, #tpu.memory_space<vmem>>, vector<2x64xf32>,
    } else {
    }
    return
  }
  func.func @transform_0(%arg0: i32, %arg1: i32) -> (i32, i32, i32) {
    %c0_i32 = arith.constant 0 : i32
    %c0_i32_0 = arith.constant 0 : i32
    return %arg0, %c0_i32, %arg1 : i32, i32, i32
  }
  func.func @transform_1(%arg0: i32, %arg1: i32) -> (i32, i32) {
    %c0_i32 = arith.constant 0 : i32
    %c0_i32_0 = arith.constant 0 : i32
    %c0_i32_1 = arith.constant 0 : i32
    return %c0_i32, %c0_i32_0 : i32, i32
  }
  func.func @transform_2(%arg0: i32, %arg1: i32) -> (i32, i32) {
    %c0_i32 = arith.constant 0 : i32
    %c0_i32_0 = arith.constant 0 : i32
    %c0_i32_1 = arith.constant 0 : i32
    return %c0_i32, %c0_i32_0 : i32, i32
  }
  func.func @transform_3(%arg0: i32, %arg1: i32) -> (i32, i32) {
    %c0_i32 = arith.constant 0 : i32
    %c0_i32_0 = arith.constant 0 : i32
    return %arg0, %c0_i32 : i32, i32
  }
}

</mosaic_0001>

<llo_original>
// kernel: tpu_custom_call.1
$region0: #{tpu_custom_call.1}
  #allocation0 [shape = 'u32[]', space=smem, size = 0x4, offset = 0x4, fixed_abs, tag = 'smem constant byte address 0x4 - core index']
  #allocation1 [shape = 'u32[144,128]{1,0:T(1,128)}', space=vmem, size = 0x12000, scoped, tag = 'internal scratch']
  #allocation2 [shape = 'f32[2,64]{1,0:T(2,128)}', space=vmem, size = 0x400, scoped, tag = 'scratch operand']
  #allocation3 [shape = 'f32[2,64]{1,0:T(2,128)}', space=vmem, size = 0x400, scoped, tag = 'scratch operand']
  %s0 = inlined_call_operand.hbm [shape: f32[2,64,256], index: 0, kind: input, shape index: {}]
  %s1 = inlined_call_operand.vmem [shape: f32[4,64], index: 1, kind: input, shape index: {}]
  %s2 = inlined_call_operand.vmem [shape: f32[64,4], index: 2, kind: input, shape index: {}]
  %s3 = inlined_call_operand.hbm [shape: f32[2,64], index: 3, kind: output, shape index: {}]
  %s4 = sld [smem:[#allocation0]]
  $region38: #{tpu_custom_call.1} parent=0
    _
  %s6 = ssub.s32 1, %s4
  %s7 = scalar_select 0, %s6, %s4
  $region1: #{tpu_custom_call.1} parent=0
    #allocation4 [shape = 'u8[131072]{0}', space=vmem, size = 0x20000, scoped, tag = 'input window, operand 0, single buffered']
    #allocation5 [shape = 's32[1]{0}', space=sflag, size = 0x4, scoped, tag = 'scoped memory for tpu_custom_call.1']
    #allocation6 [shape = 's32[1]{0}', space=sflag, size = 0x4, scoped, tag = 'scoped memory for tpu_custom_call.1']
    #allocation7 [shape = 'u8[1024]{0}', space=vmem, size = 0x400, scoped, tag = 'output window, operand 0, single buffered']
    %8 = vsyncpa [#allocation5], 0
    %9 = vsyncpa [#allocation6], 0
    // Predicated region
    $region2: #{tpu_custom_call.1} parent=1 // pred_check
      _
    $region3: #{tpu_custom_call.1} parent=1 // pred_check_branch
      %11 = sbr.rel (0) target = $region5
    $region4: #{tpu_custom_call.1} parent=1 // pred_region
      %s13 = ssub.s32 4096, 4096
      %14 = vsyncadd [#allocation5], %s13
      %s15 = sshll.u32 [#allocation4], 4
      %s16 = int_to_ptr.vmem [resolvable:$true] %s15
      %21 = dma.hbm_to_vmem [thread:$0]  %s0, 4096, %s16, [#allocation5], 256, 256, 16
    $region5: #{tpu_custom_call.1} parent=1 // pred_fallthru
      _
    // Predicated region
    $region6: #{tpu_custom_call.1} parent=1 // pred_check
      _
    $region7: #{tpu_custom_call.1} parent=1 // pred_check_branch
      %23 = sbr.rel (0) target = $region9
    $region8: #{tpu_custom_call.1} parent=1 // pred_region
      _
    $region9: #{tpu_custom_call.1} parent=1 // pred_fallthru
      _
    // Predicated region
    $region10: #{tpu_custom_call.1} parent=1 // pred_check
      _
    $region11: #{tpu_custom_call.1} parent=1 // pred_check_branch
      %25 = sbr.rel (0) target = $region13
    $region12: #{tpu_custom_call.1} parent=1 // pred_region
      _
    $region13: #{tpu_custom_call.1} parent=1 // pred_fallthru
      _
    // Predicated region
    $region14: #{tpu_custom_call.1} parent=1 // pred_check
      _
    $region15: #{tpu_custom_call.1} parent=1 // pred_check_branch
      %27 = sbr.rel (0) target = $region17
    $region16: #{tpu_custom_call.1} parent=1 // pred_region
      %28 = dma.done [#allocation5], 4096
    $region17: #{tpu_custom_call.1} parent=1 // pred_fallthru
      _
    %v29 = vld [vmem:[#allocation4] sm:$0xff]
    %v30 = vld [vmem:[#allocation4 + $0x8] sm:$0xff]
    %v31 = vld [vmem:[#allocation4 + $0x10] sm:$0xff]
    %v32 = vld [vmem:[#allocation4 + $0x18] sm:$0xff]
    %v33 = vld [vmem:[#allocation4 + $0x20] sm:$0xff]
    %v34 = vld [vmem:[#allocation4 + $0x28] sm:$0xff]
    %v35 = vld [vmem:[#allocation4 + $0x30] sm:$0xff]
    %v36 = vld [vmem:[#allocation4 + $0x38] sm:$0xff]
    %v37 = vld [vmem:[#allocation4 + $0x40] sm:$0xff]
    %v38 = vld [vmem:[#allocation4 + $0x48] sm:$0xff]
    %v39 = vld [vmem:[#allocation4 + $0x50] sm:$0xff]
    %v40 = vld [vmem:[#allocation4 + $0x58] sm:$0xff]
    %v41 = vld [vmem:[#allocation4 + $0x60] sm:$0xff]
    %v42 = vld [vmem:[#allocation4 + $0x68] sm:$0xff]
    %v43 = vld [vmem:[#allocation4 + $0x70] sm:$0xff]
    %v44 = vld [vmem:[#allocation4 + $0x78] sm:$0xff]
    %v45 = vld [vmem:[#allocation4 + $0x80] sm:$0xff]
    %v46 = vld [vmem:[#allocation4 + $0x88] sm:$0xff]
    %v47 = vld [vmem:[#allocation4 + $0x90] sm:$0xff]
    %v48 = vld [vmem:[#allocation4 + $0x98] sm:$0xff]
    %v49 = vld [vmem:[#allocation4 + $0xa0] sm:$0xff]
    %v50 = vld [vmem:[#allocation4 + $0xa8] sm:$0xff]
    %v51 = vld [vmem:[#allocation4 + $0xb0] sm:$0xff]
    %v52 = vld [vmem:[#allocation4 + $0xb8] sm:$0xff]
    %v53 = vld [vmem:[#allocation4 + $0xc0] sm:$0xff]
    %v54 = vld [vmem:[#allocation4 + $0xc8] sm:$0xff]
    %v55 = vld [vmem:[#allocation4 + $0xd0] sm:$0xff]
    %v56 = vld [vmem:[#allocation4 + $0xd8] sm:$0xff]
    %v57 = vld [vmem:[#allocation4 + $0xe0] sm:$0xff]
    %v58 = vld [vmem:[#allocation4 + $0xe8] sm:$0xff]
    %v59 = vld [vmem:[#allocation4 + $0xf0] sm:$0xff]
    %v60 = vld [vmem:[#allocation4 + $0xf8] sm:$0xff]
    %v61 = vadd.f32 %v29, %v30
    %62 = vadd.xlane.f32.xlu0 %v61
    %v63 = vpop.xlane.xlu0 %62
    %v64 = vadd.f32 %v31, %v32
    %65 = vadd.xlane.f32.xlu0 %v64
    %v66 = vpop.xlane.xlu0 %65
    %v67 = vadd.f32 %v33, %v34
    %68 = vadd.xlane.f32.xlu0 %v67
    %v69 = vpop.xlane.xlu0 %68
    %v70 = vadd.f32 %v35, %v36
    %71 = vadd.xlane.f32.xlu0 %v70
    %v72 = vpop.xlane.xlu0 %71
    %v73 = vadd.f32 %v37, %v38
    %74 = vadd.xlane.f32.xlu0 %v73
    %v75 = vpop.xlane.xlu0 %74
    %v76 = vadd.f32 %v39, %v40
    %77 = vadd.xlane.f32.xlu0 %v76
    %v78 = vpop.xlane.xlu0 %77
    %v79 = vadd.f32 %v41, %v42
    %80 = vadd.xlane.f32.xlu0 %v79
    %v81 = vpop.xlane.xlu0 %80
    %v82 = vadd.f32 %v43, %v44
    %83 = vadd.xlane.f32.xlu0 %v82
    %v84 = vpop.xlane.xlu0 %83
    %v85 = vadd.f32 %v45, %v46
    %86 = vadd.xlane.f32.xlu0 %v85
    %v87 = vpop.xlane.xlu0 %86
    %v88 = vadd.f32 %v47, %v48
    %89 = vadd.xlane.f32.xlu0 %v88
    %v90 = vpop.xlane.xlu0 %89
    %v91 = vadd.f32 %v49, %v50
    %92 = vadd.xlane.f32.xlu0 %v91
    %v93 = vpop.xlane.xlu0 %92
    %v94 = vadd.f32 %v51, %v52
    %95 = vadd.xlane.f32.xlu0 %v94
    %v96 = vpop.xlane.xlu0 %95
    %v97 = vadd.f32 %v53, %v54
    %98 = vadd.xlane.f32.xlu0 %v97
    %v99 = vpop.xlane.xlu0 %98
    %v100 = vadd.f32 %v55, %v56
    %101 = vadd.xlane.f32.xlu0 %v100
    %v102 = vpop.xlane.xlu0 %101
    %v103 = vadd.f32 %v57, %v58
    %104 = vadd.xlane.f32.xlu0 %v103
    %v105 = vpop.xlane.xlu0 %104
    %v106 = vadd.f32 %v59, %v60
    %107 = vadd.xlane.f32.xlu0 %v106
    %v108 = vpop.xlane.xlu0 %107
    %v109 = vmax.f32 %v29, %v30
    %110 = vmax.xlane.f32.xlu0 %v109
    %v111 = vpop.xlane.xlu0 %110
    %v112 = vmax.f32 %v31, %v32
    %113 = vmax.xlane.f32.xlu0 %v112
    %v114 = vpop.xlane.xlu0 %113
    %v115 = vmax.f32 %v33, %v34
    %116 = vmax.xlane.f32.xlu0 %v115
    %v117 = vpop.xlane.xlu0 %116
    %v118 = vmax.f32 %v35, %v36
    %119 = vmax.xlane.f32.xlu0 %v118
    %v120 = vpop.xlane.xlu0 %119
    %v121 = vmax.f32 %v37, %v38
    %122 = vmax.xlane.f32.xlu0 %v121
    %v123 = vpop.xlane.xlu0 %122
    %v124 = vmax.f32 %v39, %v40
    %125 = vmax.xlane.f32.xlu0 %v124
    %v126 = vpop.xlane.xlu0 %125
    %v127 = vmax.f32 %v41, %v42
    %128 = vmax.xlane.f32.xlu0 %v127
    %v129 = vpop.xlane.xlu0 %128
    %v130 = vmax.f32 %v43, %v44
    %131 = vmax.xlane.f32.xlu0 %v130
    %v132 = vpop.xlane.xlu0 %131
    %v133 = vmax.f32 %v45, %v46
    %134 = vmax.xlane.f32.xlu0 %v133
    %v135 = vpop.xlane.xlu0 %134
    %v136 = vmax.f32 %v47, %v48
    %137 = vmax.xlane.f32.xlu0 %v136
    %v138 = vpop.xlane.xlu0 %137
    %v139 = vmax.f32 %v49, %v50
    %140 = vmax.xlane.f32.xlu0 %v139
    %v141 = vpop.xlane.xlu0 %140
    %v142 = vmax.f32 %v51, %v52
    %143 = vmax.xlane.f32.xlu0 %v142
    %v144 = vpop.xlane.xlu0 %143
    %v145 = vmax.f32 %v53, %v54
    %146 = vmax.xlane.f32.xlu0 %v145
    %v147 = vpop.xlane.xlu0 %146
    %v148 = vmax.f32 %v55, %v56
    %149 = vmax.xlane.f32.xlu0 %v148
    %v150 = vpop.xlane.xlu0 %149
    %v151 = vmax.f32 %v57, %v58
    %152 = vmax.xlane.f32.xlu0 %v151
    %v153 = vpop.xlane.xlu0 %152
    %v154 = vmax.f32 %v59, %v60
    %155 = vmax.xlane.f32.xlu0 %v154
    %v156 = vpop.xlane.xlu0 %155
    %p157 = scmp.eq.s32.totalorder 0, 0
    // Predicated region
    $region18: #{tpu_custom_call.1} parent=1 // pred_check
      %p158 = pneg %p157
    $region19: #{tpu_custom_call.1} parent=1 // pred_check_branch
      %160 = sbr.rel (%p158) target = $region21
    $region20: #{tpu_custom_call.1} parent=1 // pred_region
      %v177 = vlaneseq
      %v178 = vand.u32 %v177, 127
      %v179 = vlaneseq
      %v180 = vshrl.u32 %v179, 7
      %v181 = vsub.s32 %v178, %v180
      %v182 = vrot.slane %v63, %v181
      %v183 = vadd.s32 %v178, 4294967288
      %v184 = vlaneseq
      %v185 = vshrl.u32 %v184, 7
      %v186 = vsub.s32 %v183, %v185
      %v187 = vrot.slane %v66, %v186
      %vm188 = vcmask 130112
      %v189 = vsel %vm188, %v187, %v182
      %v190 = vadd.s32 %v178, 4294967280
      %v191 = vlaneseq
      %v192 = vshrl.u32 %v191, 7
      %v193 = vsub.s32 %v190, %v192
      %v194 = vrot.slane %v69, %v193
      %vm195 = vcmask 195712
      %v196 = vsel %vm195, %v194, %v189
      %v197 = vadd.s32 %v178, 4294967272
      %v198 = vlaneseq
      %v199 = vshrl.u32 %v198, 7
      %v200 = vsub.s32 %v197, %v199
      %v201 = vrot.slane %v72, %v200
      %vm202 = vcmask 261312
      %v203 = vsel %vm202, %v201, %v196
      %v204 = vadd.s32 %v178, 4294967264
      %v205 = vlaneseq
      %v206 = vshrl.u32 %v205, 7
      %v207 = vsub.s32 %v204, %v206
      %v208 = vrot.slane %v75, %v207
      %vm209 = vcmask 326912
      %v210 = vsel %vm209, %v208, %v203
      %v211 = vadd.s32 %v178, 4294967256
      %v212 = vlaneseq
      %v213 = vshrl.u32 %v212, 7
      %v214 = vsub.s32 %v211, %v213
      %v215 = vrot.slane %v78, %v214
      %vm216 = vcmask 392512
      %v217 = vsel %vm216, %v215, %v210
      %v218 = vadd.s32 %v178, 4294967248
      %v219 = vlaneseq
      %v220 = vshrl.u32 %v219, 7
      %v221 = vsub.s32 %v218, %v220
      %v222 = vrot.slane %v81, %v221
      %vm223 = vcmask 458112
      %v224 = vsel %vm223, %v222, %v217
      %v225 = vadd.s32 %v178, 4294967240
      %v226 = vlaneseq
      %v227 = vshrl.u32 %v226, 7
      %v228 = vsub.s32 %v225, %v227
      %v229 = vrot.slane %v84, %v228
      %vm230 = vcmask 523712
      %v231 = vsel %vm230, %v229, %v224
      %v232 = vlaneseq
      %v233 = vshrl.u32 %v232, 7
      %v234 = vsub.s32 %v178, %v233
      %v235 = vrot.slane %v87, %v234
      %v236 = vlaneseq
      %v237 = vshrl.u32 %v236, 7
      %v238 = vsub.s32 %v183, %v237
      %v239 = vrot.slane %v90, %v238
      %v240 = vsel %vm188, %v239, %v235
      %v241 = vlaneseq
      %v242 = vshrl.u32 %v241, 7
      %v243 = vsub.s32 %v190, %v242
      %v244 = vrot.slane %v93, %v243
      %v245 = vsel %vm195, %v244, %v240
      %v246 = vlaneseq
      %v247 = vshrl.u32 %v246, 7
      %v248 = vsub.s32 %v197, %v247
      %v249 = vrot.slane %v96, %v248
      %v250 = vsel %vm202, %v249, %v245
      %v251 = vlaneseq
      %v252 = vshrl.u32 %v251, 7
      %v253 = vsub.s32 %v204, %v252
      %v254 = vrot.slane %v99, %v253
      %v255 = vsel %vm209, %v254, %v250
      %v256 = vlaneseq
      %v257 = vshrl.u32 %v256, 7
      %v258 = vsub.s32 %v211, %v257
      %v259 = vrot.slane %v102, %v258
      %v260 = vsel %vm216, %v259, %v255
      %v261 = vlaneseq
      %v262 = vshrl.u32 %v261, 7
      %v263 = vsub.s32 %v218, %v262
      %v264 = vrot.slane %v105, %v263
      %v265 = vsel %vm223, %v264, %v260
      %v266 = vlaneseq
      %v267 = vshrl.u32 %v266, 7
      %v268 = vsub.s32 %v225, %v267
      %v269 = vrot.slane %v108, %v268
      %v270 = vsel %vm230, %v269, %v265
      %vm271 = vcmask 1041409
      %v272 = vsel %vm271, %v270, %v231
      %vm274 = vcmask 517120
      %275 = vst.msk [vmem:[#allocation2] sm:$0x3] %vm274, %v272
      %v292 = vlaneseq
      %v293 = vshrl.u32 %v292, 7
      %v294 = vsub.s32 %v178, %v293
      %v295 = vrot.slane %v111, %v294
      %v296 = vlaneseq
      %v297 = vshrl.u32 %v296, 7
      %v298 = vsub.s32 %v183, %v297
      %v299 = vrot.slane %v114, %v298
      %v300 = vsel %vm188, %v299, %v295
      %v301 = vlaneseq
      %v302 = vshrl.u32 %v301, 7
      %v303 = vsub.s32 %v190, %v302
      %v304 = vrot.slane %v117, %v303
      %v305 = vsel %vm195, %v304, %v300
      %v306 = vlaneseq
      %v307 = vshrl.u32 %v306, 7
      %v308 = vsub.s32 %v197, %v307
      %v309 = vrot.slane %v120, %v308
      %v310 = vsel %vm202, %v309, %v305
      %v311 = vlaneseq
      %v312 = vshrl.u32 %v311, 7
      %v313 = vsub.s32 %v204, %v312
      %v314 = vrot.slane %v123, %v313
      %v315 = vsel %vm209, %v314, %v310
      %v316 = vlaneseq
      %v317 = vshrl.u32 %v316, 7
      %v318 = vsub.s32 %v211, %v317
      %v319 = vrot.slane %v126, %v318
      %v320 = vsel %vm216, %v319, %v315
      %v321 = vlaneseq
      %v322 = vshrl.u32 %v321, 7
      %v323 = vsub.s32 %v218, %v322
      %v324 = vrot.slane %v129, %v323
      %v325 = vsel %vm223, %v324, %v320
      %v326 = vlaneseq
      %v327 = vshrl.u32 %v326, 7
      %v328 = vsub.s32 %v225, %v327
      %v329 = vrot.slane %v132, %v328
      %v330 = vsel %vm230, %v329, %v325
      %v331 = vlaneseq
      %v332 = vshrl.u32 %v331, 7
      %v333 = vsub.s32 %v178, %v332
      %v334 = vrot.slane %v135, %v333
      %v335 = vlaneseq
      %v336 = vshrl.u32 %v335, 7
      %v337 = vsub.s32 %v183, %v336
      %v338 = vrot.slane %v138, %v337
      %v339 = vsel %vm188, %v338, %v334
      %v340 = vlaneseq
      %v341 = vshrl.u32 %v340, 7
      %v342 = vsub.s32 %v190, %v341
      %v343 = vrot.slane %v141, %v342
      %v344 = vsel %vm195, %v343, %v339
      %v345 = vlaneseq
      %v346 = vshrl.u32 %v345, 7
      %v347 = vsub.s32 %v197, %v346
      %v348 = vrot.slane %v144, %v347
      %v349 = vsel %vm202, %v348, %v344
      %v350 = vlaneseq
      %v351 = vshrl.u32 %v350, 7
      %v352 = vsub.s32 %v204, %v351
      %v353 = vrot.slane %v147, %v352
      %v354 = vsel %vm209, %v353, %v349
      %v355 = vlaneseq
      %v356 = vshrl.u32 %v355, 7
      %v357 = vsub.s32 %v211, %v356
      %v358 = vrot.slane %v150, %v357
      %v359 = vsel %vm216, %v358, %v354
      %v360 = vlaneseq
      %v361 = vshrl.u32 %v360, 7
      %v362 = vsub.s32 %v218, %v361
      %v363 = vrot.slane %v153, %v362
      %v364 = vsel %vm223, %v363, %v359
      %v365 = vlaneseq
      %v366 = vshrl.u32 %v365, 7
      %v367 = vsub.s32 %v225, %v366
      %v368 = vrot.slane %v156, %v367
      %v369 = vsel %vm230, %v368, %v364
      %v370 = vsel %vm271, %v369, %v330
      %372 = vst.msk [vmem:[#allocation3] sm:$0x3] %vm274, %v370
    $region21: #{tpu_custom_call.1} parent=1 // pred_fallthru
      _
    %p373 = scmp.gt.s32.totalorder 0, 0
    // Predicated region
    $region22: #{tpu_custom_call.1} parent=1 // pred_check
      %p374 = pneg %p373
    $region23: #{tpu_custom_call.1} parent=1 // pred_check_branch
      %376 = sbr.rel (%p374) target = $region25
    $region24: #{tpu_custom_call.1} parent=1 // pred_region
      %v377 = vld [vmem:[#allocation2] sm:$0x3]
      %v394 = vlaneseq
      %v395 = vand.u32 %v394, 127
      %v396 = vlaneseq
      %v397 = vshrl.u32 %v396, 7
      %v398 = vsub.s32 %v395, %v397
      %v399 = vrot.slane %v63, %v398
      %v400 = vadd.s32 %v395, 4294967288
      %v401 = vlaneseq
      %v402 = vshrl.u32 %v401, 7
      %v403 = vsub.s32 %v400, %v402
      %v404 = vrot.slane %v66, %v403
      %vm405 = vcmask 130112
      %v406 = vsel %vm405, %v404, %v399
      %v407 = vadd.s32 %v395, 4294967280
      %v408 = vlaneseq
      %v409 = vshrl.u32 %v408, 7
      %v410 = vsub.s32 %v407, %v409
      %v411 = vrot.slane %v69, %v410
      %vm412 = vcmask 195712
      %v413 = vsel %vm412, %v411, %v406
      %v414 = vadd.s32 %v395, 4294967272
      %v415 = vlaneseq
      %v416 = vshrl.u32 %v415, 7
      %v417 = vsub.s32 %v414, %v416
      %v418 = vrot.slane %v72, %v417
      %vm419 = vcmask 261312
      %v420 = vsel %vm419, %v418, %v413
      %v421 = vadd.s32 %v395, 4294967264
      %v422 = vlaneseq
      %v423 = vshrl.u32 %v422, 7
      %v424 = vsub.s32 %v421, %v423
      %v425 = vrot.slane %v75, %v424
      %vm426 = vcmask 326912
      %v427 = vsel %vm426, %v425, %v420
      %v428 = vadd.s32 %v395, 4294967256
      %v429 = vlaneseq
      %v430 = vshrl.u32 %v429, 7
      %v431 = vsub.s32 %v428, %v430
      %v432 = vrot.slane %v78, %v431
      %vm433 = vcmask 392512
      %v434 = vsel %vm433, %v432, %v427
      %v435 = vadd.s32 %v395, 4294967248
      %v436 = vlaneseq
      %v437 = vshrl.u32 %v436, 7
      %v438 = vsub.s32 %v435, %v437
      %v439 = vrot.slane %v81, %v438
      %vm440 = vcmask 458112
      %v441 = vsel %vm440, %v439, %v434
      %v442 = vadd.s32 %v395, 4294967240
      %v443 = vlaneseq
      %v444 = vshrl.u32 %v443, 7
      %v445 = vsub.s32 %v442, %v444
      %v446 = vrot.slane %v84, %v445
      %vm447 = vcmask 523712
      %v448 = vsel %vm447, %v446, %v441
      %v449 = vlaneseq
      %v450 = vshrl.u32 %v449, 7
      %v451 = vsub.s32 %v395, %v450
      %v452 = vrot.slane %v87, %v451
      %v453 = vlaneseq
      %v454 = vshrl.u32 %v453, 7
      %v455 = vsub.s32 %v400, %v454
      %v456 = vrot.slane %v90, %v455
      %v457 = vsel %vm405, %v456, %v452
      %v458 = vlaneseq
      %v459 = vshrl.u32 %v458, 7
      %v460 = vsub.s32 %v407, %v459
      %v461 = vrot.slane %v93, %v460
      %v462 = vsel %vm412, %v461, %v457
      %v463 = vlaneseq
      %v464 = vshrl.u32 %v463, 7
      %v465 = vsub.s32 %v414, %v464
      %v466 = vrot.slane %v96, %v465
      %v467 = vsel %vm419, %v466, %v462
      %v468 = vlaneseq
      %v469 = vshrl.u32 %v468, 7
      %v470 = vsub.s32 %v421, %v469
      %v471 = vrot.slane %v99, %v470
      %v472 = vsel %vm426, %v471, %v467
      %v473 = vlaneseq
      %v474 = vshrl.u32 %v473, 7
      %v475 = vsub.s32 %v428, %v474
      %v476 = vrot.slane %v102, %v475
      %v477 = vsel %vm433, %v476, %v472
      %v478 = vlaneseq
      %v479 = vshrl.u32 %v478, 7
      %v480 = vsub.s32 %v435, %v479
      %v481 = vrot.slane %v105, %v480
      %v482 = vsel %vm440, %v481, %v477
      %v483 = vlaneseq
      %v484 = vshrl.u32 %v483, 7
      %v485 = vsub.s32 %v442, %v484
      %v486 = vrot.slane %v108, %v485
      %v487 = vsel %vm447, %v486, %v482
      %vm488 = vcmask 1041409
      %v489 = vsel %vm488, %v487, %v448
      %v491 = vadd.f32 %v377, %v489
      %vm492 = vcmask 517120
      %493 = vst.msk [vmem:[#allocation2] sm:$0x3] %vm492, %v491
      %v494 = vld [vmem:[#allocation3] sm:$0x3]
      %v511 = vlaneseq
      %v512 = vshrl.u32 %v511, 7
      %v513 = vsub.s32 %v395, %v512
      %v514 = vrot.slane %v111, %v513
      %v515 = vlaneseq
      %v516 = vshrl.u32 %v515, 7
      %v517 = vsub.s32 %v400, %v516
      %v518 = vrot.slane %v114, %v517
      %v519 = vsel %vm405, %v518, %v514
      %v520 = vlaneseq
      %v521 = vshrl.u32 %v520, 7
      %v522 = vsub.s32 %v407, %v521
      %v523 = vrot.slane %v117, %v522
      %v524 = vsel %vm412, %v523, %v519
      %v525 = vlaneseq
      %v526 = vshrl.u32 %v525, 7
      %v527 = vsub.s32 %v414, %v526
      %v528 = vrot.slane %v120, %v527
      %v529 = vsel %vm419, %v528, %v524
      %v530 = vlaneseq
      %v531 = vshrl.u32 %v530, 7
      %v532 = vsub.s32 %v421, %v531
      %v533 = vrot.slane %v123, %v532
      %v534 = vsel %vm426, %v533, %v529
      %v535 = vlaneseq
      %v536 = vshrl.u32 %v535, 7
      %v537 = vsub.s32 %v428, %v536
      %v538 = vrot.slane %v126, %v537
      %v539 = vsel %vm433, %v538, %v534
      %v540 = vlaneseq
      %v541 = vshrl.u32 %v540, 7
      %v542 = vsub.s32 %v435, %v541
      %v543 = vrot.slane %v129, %v542
      %v544 = vsel %vm440, %v543, %v539
      %v545 = vlaneseq
      %v546 = vshrl.u32 %v545, 7
      %v547 = vsub.s32 %v442, %v546
      %v548 = vrot.slane %v132, %v547
      %v549 = vsel %vm447, %v548, %v544
      %v550 = vlaneseq
      %v551 = vshrl.u32 %v550, 7
      %v552 = vsub.s32 %v395, %v551
      %v553 = vrot.slane %v135, %v552
      %v554 = vlaneseq
      %v555 = vshrl.u32 %v554, 7
      %v556 = vsub.s32 %v400, %v555
      %v557 = vrot.slane %v138, %v556
      %v558 = vsel %vm405, %v557, %v553
      %v559 = vlaneseq
      %v560 = vshrl.u32 %v559, 7
      %v561 = vsub.s32 %v407, %v560
      %v562 = vrot.slane %v141, %v561
      %v563 = vsel %vm412, %v562, %v558
      %v564 = vlaneseq
      %v565 = vshrl.u32 %v564, 7
      %v566 = vsub.s32 %v414, %v565
      %v567 = vrot.slane %v144, %v566
      %v568 = vsel %vm419, %v567, %v563
      %v569 = vlaneseq
      %v570 = vshrl.u32 %v569, 7
      %v571 = vsub.s32 %v421, %v570
      %v572 = vrot.slane %v147, %v571
      %v573 = vsel %vm426, %v572, %v568
      %v574 = vlaneseq
      %v575 = vshrl.u32 %v574, 7
      %v576 = vsub.s32 %v428, %v575
      %v577 = vrot.slane %v150, %v576
      %v578 = vsel %vm433, %v577, %v573
      %v579 = vlaneseq
      %v580 = vshrl.u32 %v579, 7
      %v581 = vsub.s32 %v435, %v580
      %v582 = vrot.slane %v153, %v581
      %v583 = vsel %vm440, %v582, %v578
      %v584 = vlaneseq
      %v585 = vshrl.u32 %v584, 7
      %v586 = vsub.s32 %v442, %v585
      %v587 = vrot.slane %v156, %v586
      %v588 = vsel %vm447, %v587, %v583
      %v589 = vsel %vm488, %v588, %v549
      %v591 = vmax.f32 %v494, %v589
      %592 = vst.msk [vmem:[#allocation3] sm:$0x3] %vm492, %v591
    $region25: #{tpu_custom_call.1} parent=1 // pred_fallthru
      _
    // Predicated region
    $region26: #{tpu_custom_call.1} parent=1 // pred_check
      %p593 = pneg %p157
    $region27: #{tpu_custom_call.1} parent=1 // pred_check_branch
      %595 = sbr.rel (%p593) target = $region29
    $region28: #{tpu_custom_call.1} parent=1 // pred_region
      %v596 = vld [vmem:[#allocation2] sm:$0x3]
      %v597 = vmul.f32 %v596, 0.00390625
      %v598 = vld [vmem:[#allocation3] sm:$0x3]
      %v600 = vrot.slane %v598, 6
      %vm602 = vcmask 1041408
      %v603 = vsel %vm602, %v597, %v600
      %v604 = vld [vmem:[%s1] sm:$0xf]
      %v605 = vld [vmem:[%s2] sm:$0xff]
      %v606 = vld [vmem:[%s2 + $0x8] sm:$0xff]
      %v607 = vld [vmem:[%s2 + $0x10] sm:$0xff]
      %v608 = vld [vmem:[%s2 + $0x18] sm:$0xff]
      %v609 = vld [vmem:[%s2 + $0x20] sm:$0xff]
      %v610 = vld [vmem:[%s2 + $0x28] sm:$0xff]
      %v611 = vld [vmem:[%s2 + $0x30] sm:$0xff]
      %v612 = vld [vmem:[%s2 + $0x38] sm:$0xff]
      %vm613 = vcmask 523264
      %v615 = vsel %vm613, %v603, 0
      %v618 = vsel %vm613, %v604, 0
      %620 = vmatprep.subr.mxu0 0.0
      %621 = vmatpush1.xpose.msra.mxu0 0.0
      %622 = vmatprep.subr.mxu0 0.0
      %623 = vmatpush1.xpose.msra.mxu0 0.0
      %624 = vmatprep.subr.mxu0 0.0
      %625 = vmatpush1.xpose.msra.mxu0 0.0
      %626 = vmatprep.subr.mxu0 0.0
      %627 = vmatpush1.xpose.msra.mxu0 0.0
      %628 = vmatprep.subr.mxu0 0.0
      %629 = vmatpush1.xpose.msra.mxu0 0.0
      %630 = vmatprep.subr.mxu0 0.0
      %631 = vmatpush1.xpose.msra.mxu0 0.0
      %632 = vmatprep.subr.mxu0 0.0
      %633 = vmatpush1.xpose.msra.mxu0 0.0
      %634 = vmatprep.subr.mxu0 0.0
      %635 = vmatpush1.xpose.msra.mxu0 0.0
      %636 = vmatprep.subr.mxu0 0.0
      %637 = vmatpush1.xpose.msra.mxu0 0.0
      %638 = vmatprep.subr.mxu0 0.0
      %639 = vmatpush1.xpose.msra.mxu0 0.0
      %640 = vmatprep.subr.mxu0 0.0
      %641 = vmatpush1.xpose.msra.mxu0 0.0
      %642 = vmatprep.subr.mxu0 0.0
      %643 = vmatpush1.xpose.msra.mxu0 0.0
      %644 = vmatprep.subr.mxu0 0.0
      %645 = vmatpush1.xpose.msra.mxu0 0.0
      %646 = vmatprep.subr.mxu0 0.0
      %647 = vmatpush1.xpose.msra.mxu0 0.0
      %648 = vmatprep.subr.mxu0 0.0
      %649 = vmatpush1.xpose.msra.mxu0 0.0
      %650 = vmatprep.subr.mxu0 0.0
      %651 = vmatpush1.xpose.msra.mxu0 %v618
      %652 = vmatprep.subr.mxu0 0.0
      %653 = vmatpush2.xpose.msra.mxu0 0.0
      %654 = vmatprep.subr.mxu0 0.0
      %655 = vmatpush2.xpose.msra.mxu0 0.0
      %656 = vmatprep.subr.mxu0 0.0
      %657 = vmatpush2.xpose.msra.mxu0 0.0
      %658 = vmatprep.subr.mxu0 0.0
      %659 = vmatpush2.xpose.msra.mxu0 0.0
      %660 = vmatprep.subr.mxu0 0.0
      %661 = vmatpush2.xpose.msra.mxu0 0.0
      %662 = vmatprep.subr.mxu0 0.0
      %663 = vmatpush2.xpose.msra.mxu0 0.0
      %664 = vmatprep.subr.mxu0 0.0
      %665 = vmatpush2.xpose.msra.mxu0 0.0
      %666 = vmatprep.subr.mxu0 0.0
      %667 = vmatpush2.xpose.msra.mxu0 0.0
      %668 = vmatprep.subr.mxu0 0.0
      %669 = vmatpush2.xpose.msra.mxu0 0.0
      %670 = vmatprep.subr.mxu0 0.0
      %671 = vmatpush2.xpose.msra.mxu0 0.0
      %672 = vmatprep.subr.mxu0 0.0
      %673 = vmatpush2.xpose.msra.mxu0 0.0
      %674 = vmatprep.subr.mxu0 0.0
      %675 = vmatpush2.xpose.msra.mxu0 0.0
      %676 = vmatprep.subr.mxu0 0.0
      %677 = vmatpush2.xpose.msra.mxu0 0.0
      %678 = vmatprep.subr.mxu0 0.0
      %679 = vmatpush2.xpose.msra.mxu0 0.0
      %680 = vmatprep.subr.mxu0 0.0
      %681 = vmatpush2.xpose.msra.mxu0 0.0
      %682 = vmatprep.subr.mxu0 0.0
      %683 = vmatpush2.xpose.msra.mxu0 0.0
      %684 = vmatprep.mubr.f32.mxu0 0.0
      %685 = vmatmul.mubr.f32.gmra.mxu0 %v615
      %v686 = vpop.f32.mrf.mxu0
      %v687 = vadd.f32 0.0, %v686
      %v688 = vpop.f32.mrf.mxu0
      %689 = vdwg.mxu0
      %v690 = vmax.f32 %v687, 0.0
      %vm691 = vcmask 31744
      %v693 = vsel %vm691, %v690, 0
      %v696 = vsel %vm691, %v605, 0
      %v699 = vsel %vm691, %v606, 0
      %v702 = vsel %vm691, %v607, 0
      %v705 = vsel %vm691, %v608, 0
      %v708 = vsel %vm691, %v609, 0
      %v711 = vsel %vm691, %v610, 0
      %v714 = vsel %vm691, %v611, 0
      %v717 = vsel %vm691, %v612, 0
      %719 = vmatprep.subr.mxu0 0.0
      %720 = vmatpush1.xpose.msra.mxu0 0.0
      %721 = vmatprep.subr.mxu0 0.0
      %722 = vmatpush1.xpose.msra.mxu0 0.0
      %723 = vmatprep.subr.mxu0 0.0
      %724 = vmatpush1.xpose.msra.mxu0 0.0
      %725 = vmatprep.subr.mxu0 0.0
      %726 = vmatpush1.xpose.msra.mxu0 0.0
      %727 = vmatprep.subr.mxu0 0.0
      %728 = vmatpush1.xpose.msra.mxu0 0.0
      %729 = vmatprep.subr.mxu0 0.0
      %730 = vmatpush1.xpose.msra.mxu0 0.0
      %731 = vmatprep.subr.mxu0 0.0
      %732 = vmatpush1.xpose.msra.mxu0 0.0
      %733 = vmatprep.subr.mxu0 0.0
      %734 = vmatpush1.xpose.msra.mxu0 0.0
      %735 = vmatprep.subr.mxu0 0.0
      %736 = vmatpush1.xpose.msra.mxu0 %v717
      %737 = vmatprep.subr.mxu0 0.0
      %738 = vmatpush1.xpose.msra.mxu0 %v714
      %739 = vmatprep.subr.mxu0 0.0
      %740 = vmatpush1.xpose.msra.mxu0 %v711
      %741 = vmatprep.subr.mxu0 0.0
      %742 = vmatpush1.xpose.msra.mxu0 %v708
      %743 = vmatprep.subr.mxu0 0.0
      %744 = vmatpush1.xpose.msra.mxu0 %v705
      %745 = vmatprep.subr.mxu0 0.0
      %746 = vmatpush1.xpose.msra.mxu0 %v702
      %747 = vmatprep.subr.mxu0 0.0
      %748 = vmatpush1.xpose.msra.mxu0 %v699
      %749 = vmatprep.subr.mxu0 0.0
      %750 = vmatpush1.xpose.msra.mxu0 %v696
      %751 = vmatprep.subr.mxu0 0.0
      %752 = vmatpush2.xpose.msra.mxu0 0.0
      %753 = vmatprep.subr.mxu0 0.0
      %754 = vmatpush2.xpose.msra.mxu0 0.0
      %755 = vmatprep.subr.mxu0 0.0
      %756 = vmatpush2.xpose.msra.mxu0 0.0
      %757 = vmatprep.subr.mxu0 0.0
      %758 = vmatpush2.xpose.msra.mxu0 0.0
      %759 = vmatprep.subr.mxu0 0.0
      %760 = vmatpush2.xpose.msra.mxu0 0.0
      %761 = vmatprep.subr.mxu0 0.0
      %762 = vmatpush2.xpose.msra.mxu0 0.0
      %763 = vmatprep.subr.mxu0 0.0
      %764 = vmatpush2.xpose.msra.mxu0 0.0
      %765 = vmatprep.subr.mxu0 0.0
      %766 = vmatpush2.xpose.msra.mxu0 0.0
      %767 = vmatprep.subr.mxu0 0.0
      %768 = vmatpush2.xpose.msra.mxu0 0.0
      %769 = vmatprep.subr.mxu0 0.0
      %770 = vmatpush2.xpose.msra.mxu0 0.0
      %771 = vmatprep.subr.mxu0 0.0
      %772 = vmatpush2.xpose.msra.mxu0 0.0
      %773 = vmatprep.subr.mxu0 0.0
      %774 = vmatpush2.xpose.msra.mxu0 0.0
      %775 = vmatprep.subr.mxu0 0.0
      %776 = vmatpush2.xpose.msra.mxu0 0.0
      %777 = vmatprep.subr.mxu0 0.0
      %778 = vmatpush2.xpose.msra.mxu0 0.0
      %779 = vmatprep.subr.mxu0 0.0
      %780 = vmatpush2.xpose.msra.mxu0 0.0
      %781 = vmatprep.subr.mxu0 0.0
      %782 = vmatpush2.xpose.msra.mxu0 0.0
      %783 = vmatprep.mubr.f32.mxu0 0.0
      %784 = vmatmul.mubr.f32.gmra.mxu0 %v693
      %v785 = vpop.f32.mrf.mxu0
      %v786 = vadd.f32 0.0, %v785
      %v787 = vpop.f32.mrf.mxu0
      %788 = vdwg.mxu0
      %v790 = vrot.slane %v786, 2
      %v792 = vadd.f32 %v786, %v790
      %v793 = vxor.u32 %v792, 2147483648
      %v794 = vmul.f32 %v793, 1.442695
      %v795 = vpow.pop %v794
      %v796 = vadd.f32 %v795, 1.0
      %v797 = vrcp.pop %v796
      %v798 = vmul.f32 1.0, %v797
      %vm799 = vcmask 517120
      %800 = vst.msk [vmem:[#allocation7] sm:$0x3] %vm799, %v798
    $region29: #{tpu_custom_call.1} parent=1 // pred_fallthru
      _
    // Predicated region
    $region30: #{tpu_custom_call.1} parent=1 // pred_check
      _
    $region31: #{tpu_custom_call.1} parent=1 // pred_check_branch
      %802 = sbr.rel (0) target = $region33
    $region32: #{tpu_custom_call.1} parent=1 // pred_region
      %s804 = ssub.s32 32, 32
      %805 = vsyncadd [#allocation6], %s804
      %s807 = sshll.u32 [#allocation7], 4
      %s808 = int_to_ptr.vmem [resolvable:$true] %s807
      %810 = dma.vmem_to_hbm [thread:$0]  %s808, 32, %s3, [#allocation6]
    $region33: #{tpu_custom_call.1} parent=1 // pred_fallthru
      _
    // Predicated region
    $region34: #{tpu_custom_call.1} parent=1 // pred_check
      _
    $region35: #{tpu_custom_call.1} parent=1 // pred_check_branch
      %812 = sbr.rel (0) target = $region37
    $region36: #{tpu_custom_call.1} parent=1 // pred_region
      %813 = dma.done [#allocation6], 32
    $region37: #{tpu_custom_call.1} parent=1 // pred_fallthru
      _
    %814 = vsyncpa [#allocation5], 1
    %815 = vsyncpa [#allocation6], 1

</llo_original>
